<compile_context>
chip_gen: v7x
topology: tpu7x:2x2x1
jax: 0.10.0
libtpu: 0.0.40
codegen_flags: <defaults>
</compile_context>

<pallas_src>
import jax
import jax.numpy as jnp
from jax.experimental import pallas as pl
from jax.experimental.pallas import tpu as pltpu


def ffn_kernel(x_ref, m_ref, w1_ref, b1_ref, w2_ref, b2_ref, o_ref):
    # x_ref : (1, Cin, TL) f32      m_ref : (1, 1, TL) f32
    # w1_ref: (H, Cin)   bf16       b1_ref: (H, 1)    f32
    # w2_ref: (Cout, H)  bf16       b2_ref: (Cout, 1) f32
    # o_ref : (1, Cout, TL) f32
    m = m_ref[0]                                   # (1, TL)   f32
    xm = x_ref[0] * m                              # mask in f32 on the VPU

    # conv1 (k=1): channel matmul on the MXU, bf16 operands, f32 accumulation.
    h = jnp.dot(w1_ref[...], xm.astype(jnp.bfloat16),
                preferred_element_type=jnp.float32) + b1_ref[...]     # (H, TL)
    h = jnp.maximum(h, 0.0)                        # ReLU (dropout = identity, eval)

    # NOTE: for strictly binary masks this multiply is redundant (m*m == m);
    # kept so non-binary masks match the PyTorch module exactly.
    hm = h * m

    # conv2 (k=1)
    y = jnp.dot(w2_ref[...], hm.astype(jnp.bfloat16),
                preferred_element_type=jnp.float32) + b2_ref[...]     # (Cout, TL)

    o_ref[0, :, :] = (y * m).astype(o_ref.dtype)   # final mask


def _pick_l_tile(L, Cin, H, Cout, max_tile=2048, vmem_budget=24 * 1024 * 1024):
    """Largest multiple of 128 that divides L, fits the VMEM budget and is
    <= max_tile; falls back to the full L (block == full dim is always legal)."""
    def fits(t):
        # double-buffered streamed tiles (x, mask, out) + in-kernel f32 intermediates
        streamed = 2 * 4 * t * (Cin + 1 + Cout)
        interm = 4 * t * (H + Cout + Cin)
        return streamed + interm <= vmem_budget

    best = None
    t = 128
    while t <= min(L, max_tile):
        if L % t == 0 and fits(t):
            best = t
        t += 128
    return best if best is not None else L


def feed_forward_network(x_ncl, mask_n1l, w1, b1, w2, b2, *, max_l_tile=2048):
    """x_ncl: (B, Cin, L) f32, mask_n1l: (B, 1, L) f32.
    w1: (H, Cin), b1: (H,), w2: (Cout, H), b2: (Cout,)  (Conv1d layout, k=1 squeezed).
    Returns (B, Cout, L), matching the PyTorch module's NCL convention."""
    B, Cin, L = x_ncl.shape
    H = w1.shape[0]
    Cout = w2.shape[0]

    tl = _pick_l_tile(L, Cin, H, Cout, max_l_tile)  # lane-dense tile when possible
    grid = (B, L // tl)

    # Weights as bf16 (halves weight DMA bytes, matches MXU peak); biases stay f32.
    w1b = w1.astype(jnp.bfloat16)
    w2b = w2.astype(jnp.bfloat16)
    b1r = b1.reshape(H, 1).astype(jnp.float32)
    b2r = b2.reshape(Cout, 1).astype(jnp.float32)

    flops = 2 * B * L * (Cin * H + H * Cout)
    bytes_accessed = (x_ncl.size * 4 + mask_n1l.size * 4 + B * Cout * L * 4
                      + (w1b.size + w2b.size) * 2 + (b1r.size + b2r.size) * 4)

    out = pl.pallas_call(
        ffn_kernel,
        out_shape=jax.ShapeDtypeStruct((B, Cout, L), jnp.float32),
        grid=grid,
        in_specs=[
            pl.BlockSpec((1, Cin, tl), lambda b, l: (b, 0, l)),   # x tile
            pl.BlockSpec((1, 1, tl), lambda b, l: (b, 0, l)),     # mask tile
            pl.BlockSpec((H, Cin), lambda b, l: (0, 0)),          # w1 (resident)
            pl.BlockSpec((H, 1), lambda b, l: (0, 0)),            # b1
            pl.BlockSpec((Cout, H), lambda b, l: (0, 0)),         # w2 (resident)
            pl.BlockSpec((Cout, 1), lambda b, l: (0, 0)),         # b2
        ],
        out_specs=pl.BlockSpec((1, Cout, tl), lambda b, l: (b, 0, l)),
        compiler_params=pltpu.CompilerParams(
            dimension_semantics=("parallel", "parallel"),
            vmem_limit_bytes=32 * 1024 * 1024,   # safe on v5e/v6e/v7x physical VMEM
        ),
        cost_estimate=pl.CostEstimate(
            flops=flops, transcendentals=0, bytes_accessed=bytes_accessed),
    )(x_ncl, mask_n1l, w1b, b1r, w2b, b2r)

    return out


def _reference(x_ncl, mask_n1l, w1, b1, w2, b2):
    # pure-JAX f32 reference of the same math (k=1 conv == matmul over channels)
    xm = x_ncl * mask_n1l
    h = jnp.einsum("hc,bcl->bhl", w1, xm) + b1[None, :, None]
    h = jnp.maximum(h, 0.0)
    hm = h * mask_n1l
    y = jnp.einsum("oh,bhl->bol", w2, hm) + b2[None, :, None]
    return y * mask_n1l


if __name__ == "__main__":
    # Module hyperparameters (small, consistent with the forward pass).
    B, Cin, Cout, H, L = 2, 4, 4, 32, 256
    kernel_size = 1          # padding is a no-op; dropout is identity at inference

    key = jax.random.PRNGKey(0)
    kx, km, k1, k2, k3, k4 = jax.random.split(key, 6)

    x = jax.random.normal(kx, (B, Cin, L), dtype=jnp.float32)
    # binary mask of shape (B, 1, L), like a length mask
    mask = (jax.random.uniform(km, (B, 1, L)) > 0.25).astype(jnp.float32)

    # PyTorch Conv1d default init: U(-1/sqrt(fan_in), 1/sqrt(fan_in)); weight (out, in, k=1).
    bound1 = 1.0 / (Cin * kernel_size) ** 0.5
    bound2 = 1.0 / (H * kernel_size) ** 0.5
    w1 = jax.random.uniform(k1, (H, Cin), minval=-bound1, maxval=bound1, dtype=jnp.float32)
    b1 = jax.random.uniform(k2, (H,), minval=-bound1, maxval=bound1, dtype=jnp.float32)
    w2 = jax.random.uniform(k3, (Cout, H), minval=-bound2, maxval=bound2, dtype=jnp.float32)
    b2 = jax.random.uniform(k4, (Cout,), minval=-bound2, maxval=bound2, dtype=jnp.float32)

    out = feed_forward_network(x, mask, w1, b1, w2, b2)
    out = jax.block_until_ready(out)

    ref = _reference(x, mask, w1, b1, w2, b2)
    assert out.shape == (B, Cout, L)
    # bf16 matmul operands (f32 accumulation) => relaxed tolerance vs f32 reference.
    assert jnp.allclose(out, ref, atol=2e-2, rtol=2e-2), "mismatch vs reference"

    print("KERNEL_OK")
</pallas_src>

<mosaic_0001>
module attributes {stable_mosaic.version = 11 : i64} {
  func.func @ffn_kernel(%arg0: i32, %arg1: i32, %arg2: memref<1x4x256xf32, #tpu.memory_space<vmem>>, %arg3: memref<1x1x256xf32, #tpu.memory_space<vmem>>, %arg4: memref<32x4xbf16, #tpu.memory_space<vmem>>, %arg5: memref<32x1xf32, #tpu.memory_space<vmem>>, %arg6: memref<4x32xbf16, #tpu.memory_space<vmem>>, %arg7: memref<4x1xf32, #tpu.memory_space<vmem>>, %arg8: memref<1x4x256xf32, #tpu.memory_space<vmem>>) attributes {dimension_semantics = [#tpu.dimension_semantics<parallel>, #tpu.dimension_semantics<parallel>], iteration_bounds = array<i64: 2, 1>, scalar_prefetch = 0 : i64, scratch_operands = 0 : i64, tpu.core_type = #tpu.core_type<tc>, window_params = [{transform_indices = @transform_0, window_bounds = array<i64: 1, 4, 256>}, {transform_indices = @transform_1, window_bounds = array<i64: 1, 1, 256>}, {pipeline_mode = #tpu.pipeline_mode<synchronous>, transform_indices = @transform_2, window_bounds = array<i64: 32, 4>}, {pipeline_mode = #tpu.pipeline_mode<synchronous>, transform_indices = @transform_3, window_bounds = array<i64: 32, 1>}, {pipeline_mode = #tpu.pipeline_mode<synchronous>, transform_indices = @transform_4, window_bounds = array<i64: 4, 32>}, {pipeline_mode = #tpu.pipeline_mode<synchronous>, transform_indices = @transform_5, window_bounds = array<i64: 4, 1>}, {transform_indices = @transform_6, window_bounds = array<i64: 1, 4, 256>}]} {
    %c0 = arith.constant 0 : index
    %c0_0 = arith.constant 0 : index
    %c0_1 = arith.constant 0 : index
    %0 = vector.load %arg3[%c0, %c0_0, %c0_1] : memref<1x1x256xf32, #tpu.memory_space<vmem>>, vector<1x1x256xf32>
    %1 = vector.shape_cast %0 : vector<1x1x256xf32> to vector<1x256xf32>
    %c0_2 = arith.constant 0 : index
    %c0_3 = arith.constant 0 : index
    %c0_4 = arith.constant 0 : index
    %2 = vector.load %arg2[%c0_2, %c0_3, %c0_4] : memref<1x4x256xf32, #tpu.memory_space<vmem>>, vector<1x4x256xf32>
    %3 = vector.shape_cast %2 : vector<1x4x256xf32> to vector<4x256xf32>
    %4 = vector.broadcast %1 : vector<1x256xf32> to vector<4x256xf32>
    %5 = arith.mulf %3, %4 : vector<4x256xf32>
    %c0_5 = arith.constant 0 : index
    %c0_6 = arith.constant 0 : index
    %6 = vector.load %arg4[%c0_5, %c0_6] : memref<32x4xbf16, #tpu.memory_space<vmem>>, vector<32x4xbf16>
    %7 = arith.truncf %5 : vector<4x256xf32> to vector<4x256xbf16>
    %cst = arith.constant dense<0.000000e+00> : vector<32x256xf32>
    %8 = tpu.matmul %6, %7, %cst {dimension_numbers = #tpu.dot_dimension_numbers<[1], [0], [0], [1], [0, 0, 1, 1], [], []>} : vector<32x4xbf16>, vector<4x256xbf16>, vector<32x256xf32> -> vector<32x256xf32>
    %c0_7 = arith.constant 0 : index
    %c0_8 = arith.constant 0 : index
    %9 = vector.load %arg5[%c0_7, %c0_8] : memref<32x1xf32, #tpu.memory_space<vmem>>, vector<32x1xf32>
    %10 = vector.broadcast %9 : vector<32x1xf32> to vector<32x256xf32>
    %11 = arith.addf %8, %10 : vector<32x256xf32>
    %cst_9 = arith.constant 0.000000e+00 : f32
    %12 = vector.broadcast %cst_9 : f32 to vector<32x256xf32>
    %13 = arith.maximumf %11, %12 : vector<32x256xf32>
    %14 = vector.broadcast %1 : vector<1x256xf32> to vector<32x256xf32>
    %15 = arith.mulf %13, %14 : vector<32x256xf32>
    %c0_10 = arith.constant 0 : index
    %c0_11 = arith.constant 0 : index
    %16 = vector.load %arg6[%c0_10, %c0_11] : memref<4x32xbf16, #tpu.memory_space<vmem>>, vector<4x32xbf16>
    %17 = arith.truncf %15 : vector<32x256xf32> to vector<32x256xbf16>
    %cst_12 = arith.constant dense<0.000000e+00> : vector<4x256xf32>
    %18 = tpu.matmul %16, %17, %cst_12 {dimension_numbers = #tpu.dot_dimension_numbers<[1], [0], [0], [1], [0, 0, 1, 1], [], []>} : vector<4x32xbf16>, vector<32x256xbf16>, vector<4x256xf32> -> vector<4x256xf32>
    %c0_13 = arith.constant 0 : index
    %c0_14 = arith.constant 0 : index
    %19 = vector.load %arg7[%c0_13, %c0_14] : memref<4x1xf32, #tpu.memory_space<vmem>>, vector<4x1xf32>
    %20 = vector.broadcast %19 : vector<4x1xf32> to vector<4x256xf32>
    %21 = arith.addf %18, %20 : vector<4x256xf32>
    %22 = vector.broadcast %1 : vector<1x256xf32> to vector<4x256xf32>
    %23 = arith.mulf %21, %22 : vector<4x256xf32>
    %c0_15 = arith.constant 0 : index
    %c0_16 = arith.constant 0 : index
    %c0_17 = arith.constant 0 : index
    %24 = vector.load %arg8[%c0_15, %c0_16, %c0_17] : memref<1x4x256xf32, #tpu.memory_space<vmem>>, vector<1x4x256xf32>
    %25 = vector.shape_cast %24 : vector<1x4x256xf32> to vector<4x256xf32>
    %26 = vector.shape_cast %23 : vector<4x256xf32> to vector<1x4x256xf32>
    tpu.vector_store %arg8[%c0_15, %c0_16, %c0_17], %26 {strides = array<i32>} : memref<1x4x256xf32, #tpu.memory_space<vmem>>, vector<1x4x256xf32>,
    return
  }
  func.func @transform_0(%arg0: i32, %arg1: i32) -> (i32, i32, i32) {
    %c0_i32 = arith.constant 0 : i32
    %c0_i32_0 = arith.constant 0 : i32
    return %arg0, %c0_i32, %arg1 : i32, i32, i32
  }
  func.func @transform_1(%arg0: i32, %arg1: i32) -> (i32, i32, i32) {
    %c0_i32 = arith.constant 0 : i32
    %c0_i32_0 = arith.constant 0 : i32
    return %arg0, %c0_i32, %arg1 : i32, i32, i32
  }
  func.func @transform_2(%arg0: i32, %arg1: i32) -> (i32, i32) {
    %c0_i32 = arith.constant 0 : i32
    %c0_i32_0 = arith.constant 0 : i32
    %c0_i32_1 = arith.constant 0 : i32
    return %c0_i32, %c0_i32_0 : i32, i32
  }
  func.func @transform_3(%arg0: i32, %arg1: i32) -> (i32, i32) {
    %c0_i32 = arith.constant 0 : i32
    %c0_i32_0 = arith.constant 0 : i32
    %c0_i32_1 = arith.constant 0 : i32
    return %c0_i32, %c0_i32_0 : i32, i32
  }
  func.func @transform_4(%arg0: i32, %arg1: i32) -> (i32, i32) {
    %c0_i32 = arith.constant 0 : i32
    %c0_i32_0 = arith.constant 0 : i32
    %c0_i32_1 = arith.constant 0 : i32
    return %c0_i32, %c0_i32_0 : i32, i32
  }
  func.func @transform_5(%arg0: i32, %arg1: i32) -> (i32, i32) {
    %c0_i32 = arith.constant 0 : i32
    %c0_i32_0 = arith.constant 0 : i32
    %c0_i32_1 = arith.constant 0 : i32
    return %c0_i32, %c0_i32_0 : i32, i32
  }
  func.func @transform_6(%arg0: i32, %arg1: i32) -> (i32, i32, i32) {
    %c0_i32 = arith.constant 0 : i32
    %c0_i32_0 = arith.constant 0 : i32
    return %arg0, %c0_i32, %arg1 : i32, i32, i32
  }
}

</mosaic_0001>

<llo_original>
// kernel: tpu_custom_call.1
$region0: #{tpu_custom_call.1}
  #allocation0 [shape = 'u32[]', space=smem, size = 0x4, offset = 0x4, fixed_abs, tag = 'smem constant byte address 0x4 - core index']
  #allocation1 [shape = 'u32[144,128]{1,0:T(1,128)}', space=vmem, size = 0x12000, scoped, tag = 'internal scratch']
  %s0 = inlined_call_operand.vmem [shape: f32[2,4,256], index: 0, kind: input, shape index: {}]
  %s1 = inlined_call_operand.vmem [shape: f32[2,1,256], index: 1, kind: input, shape index: {}]
  %s2 = inlined_call_operand.vmem [shape: bf16[32,4], index: 2, kind: input, shape index: {}]
  %s3 = inlined_call_operand.vmem [shape: f32[32,1], index: 3, kind: input, shape index: {}]
  %s4 = inlined_call_operand.vmem [shape: bf16[4,32], index: 4, kind: input, shape index: {}]
  %s5 = inlined_call_operand.vmem [shape: f32[4,1], index: 5, kind: input, shape index: {}]
  %s6 = inlined_call_operand.hbm [shape: f32[2,4,256], index: 6, kind: output, shape index: {}]
  %s7 = sld [smem:[#allocation0]]
  $region57: #{tpu_custom_call.1} parent=0
    _
  %s9 = ssub.s32 1, %s7
  %s10 = scalar_select 0, %s9, %s7
  $region1: #{tpu_custom_call.1} parent=0
    #allocation2 [shape = 'u8[8192]{0}', space=vmem, size = 0x2000, scoped, tag = 'output window, operand 0']
    #allocation3 [shape = 's32[2]{0}', space=sflag, size = 0x8, scoped, tag = 'scoped memory for tpu_custom_call.1']
    %11 = vsyncpa [#allocation3], 0
    %s12 = scalar_lea.sflag [#allocation3], 1
    %13 = vsyncpa %s12, 0
    loop: start=0, step=1, limit=4
    $region2: #{tpu_custom_call.1} parent=1 // loop_pre_header
      _
    $region3: #{tpu_custom_call.1} parent=1 // loop_header
      %s15 = sphi 0, %s19
      %p16 = scmp.ge.s32.totalorder %s15, 4
      %s22 = sphi 0, %s34
      %s23 = sphi 0, %s30
      %s24 = sphi 0, %s22
      %s25 = sphi 0, %s23
      %s26 = sphi 0, %s24
      %s27 = sphi 0, %s25
      %s39 = sphi 0, %s41
      %s42 = sphi 0, %s39
      %s43 = sphi 0, %s42
      %s59 = sphi 0, %s43
      %s67 = sphi 0, %s69
      %s70 = sphi 0, %s67
      %s71 = sphi 0, %s70
      %s87 = sphi 0, %s71
      %s91 = sphi 0, %s91
      %s93 = sphi 0, %s91
      %s94 = sphi 0, %s93
      %s108 = sphi 0, %s94
      %s112 = sphi 0, %s112
      %s114 = sphi 0, %s112
      %s115 = sphi 0, %s114
      %s129 = sphi 0, %s115
      %s133 = sphi 0, %s133
      %s135 = sphi 0, %s133
      %s136 = sphi 0, %s135
      %s150 = sphi 0, %s136
      %s154 = sphi 0, %s154
      %s156 = sphi 0, %s154
      %s157 = sphi 0, %s156
      %s171 = sphi 0, %s157
      %s179 = sphi 0, %s181
      %s182 = sphi 0, %s179
      %s183 = sphi 0, %s182
      %s199 = sphi 0, %s183
    $region4: #{tpu_custom_call.1} parent=1 // loop_header_branch
      %18 = sbr.rel (%p16) target = $region8
    $region5: #{tpu_custom_call.1} parent=1 // loop_body
      %s20 = ssub.s32 %s15, 1
      %s21 = ssub.s32 %s15, 2
      %s28 = sadd.s32 1, %s23
      %p29 = scmp.ge.s32.totalorder %s28, 1
      %s30 = scalar_select %p29, 0, %s28
      %s31 = sadd.s32 1, %s22
      %s32 = scalar_select %p29, %s31, %s22
      %p33 = scmp.ge.s32.totalorder %s32, 2
      %s34 = scalar_select %p33, 0, %s32
      %s35 = ssub.s32 %s22, %s34
      %s36 = ssub.s32 %s23, %s30
      %s37 = sor.u32 %s35, %s36
      %p38 = scmp.eq.s32.totalorder %s37, 0
      %s40 = sadd.s32 %s39, 1
      %s41 = scalar_select %p38, %s39, %s40
      %p44 = pneg %p38
      %p45 = scmp.eq.s32.totalorder %s15, 1
      %p46 = por %p44, %p45
      %p47 = scmp.ne.s32.totalorder %s39, %s42
      %p48 = scmp.eq.s32.totalorder %s15, 0
      %p49 = por %p47, %p48
      %p50 = scmp.ne.s32.totalorder %s39, %s42
      %p51 = scmp.eq.s32.totalorder %s20, 1
      %p52 = por %p50, %p51
      %p53 = scmp.ne.s32.totalorder %s42, %s43
      %p54 = scmp.eq.s32.totalorder %s20, 0
      %p55 = por %p53, %p54
      %p56 = scmp.ne.s32.totalorder %s42, %s43
      %p57 = scmp.eq.s32.totalorder %s21, 1
      %p58 = por %p56, %p57
      %p60 = scmp.ne.s32.totalorder %s43, %s59
      %p61 = scmp.eq.s32.totalorder %s21, 0
      %p62 = por %p60, %p61
      %s63 = ssub.s32 %s22, %s34
      %s64 = ssub.s32 %s23, %s30
      %s65 = sor.u32 %s63, %s64
      %p66 = scmp.eq.s32.totalorder %s65, 0
      %s68 = sadd.s32 %s67, 1
      %s69 = scalar_select %p66, %s67, %s68
      %p72 = pneg %p66
      %p73 = scmp.eq.s32.totalorder %s15, 1
      %p74 = por %p72, %p73
      %p75 = scmp.ne.s32.totalorder %s67, %s70
      %p76 = scmp.eq.s32.totalorder %s15, 0
      %p77 = por %p75, %p76
      %p78 = scmp.ne.s32.totalorder %s67, %s70
      %p79 = scmp.eq.s32.totalorder %s20, 1
      %p80 = por %p78, %p79
      %p81 = scmp.ne.s32.totalorder %s70, %s71
      %p82 = scmp.eq.s32.totalorder %s20, 0
      %p83 = por %p81, %p82
      %p84 = scmp.ne.s32.totalorder %s70, %s71
      %p85 = scmp.eq.s32.totalorder %s21, 1
      %p86 = por %p84, %p85
      %p88 = scmp.ne.s32.totalorder %s71, %s87
      %p89 = scmp.eq.s32.totalorder %s21, 0
      %p90 = por %p88, %p89
      %s92 = sadd.s32 %s91, 1
      %p95 = scmp.eq.s32.totalorder %s15, 1
      %p96 = scmp.ne.s32.totalorder %s91, %s93
      %p97 = scmp.eq.s32.totalorder %s15, 0
      %p98 = por %p96, %p97
      %p99 = scmp.ne.s32.totalorder %s91, %s93
      %p100 = scmp.eq.s32.totalorder %s20, 1
      %p101 = por %p99, %p100
      %p102 = scmp.ne.s32.totalorder %s93, %s94
      %p103 = scmp.eq.s32.totalorder %s20, 0
      %p104 = por %p102, %p103
      %p105 = scmp.ne.s32.totalorder %s93, %s94
      %p106 = scmp.eq.s32.totalorder %s21, 1
      %p107 = por %p105, %p106
      %p109 = scmp.ne.s32.totalorder %s94, %s108
      %p110 = scmp.eq.s32.totalorder %s21, 0
      %p111 = por %p109, %p110
      %s113 = sadd.s32 %s112, 1
      %p116 = scmp.eq.s32.totalorder %s15, 1
      %p117 = scmp.ne.s32.totalorder %s112, %s114
      %p118 = scmp.eq.s32.totalorder %s15, 0
      %p119 = por %p117, %p118
      %p120 = scmp.ne.s32.totalorder %s112, %s114
      %p121 = scmp.eq.s32.totalorder %s20, 1
      %p122 = por %p120, %p121
      %p123 = scmp.ne.s32.totalorder %s114, %s115
      %p124 = scmp.eq.s32.totalorder %s20, 0
      %p125 = por %p123, %p124
      %p126 = scmp.ne.s32.totalorder %s114, %s115
      %p127 = scmp.eq.s32.totalorder %s21, 1
      %p128 = por %p126, %p127
      %p130 = scmp.ne.s32.totalorder %s115, %s129
      %p131 = scmp.eq.s32.totalorder %s21, 0
      %p132 = por %p130, %p131
      %s134 = sadd.s32 %s133, 1
      %p137 = scmp.eq.s32.totalorder %s15, 1
      %p138 = scmp.ne.s32.totalorder %s133, %s135
      %p139 = scmp.eq.s32.totalorder %s15, 0
      %p140 = por %p138, %p139
      %p141 = scmp.ne.s32.totalorder %s133, %s135
      %p142 = scmp.eq.s32.totalorder %s20, 1
      %p143 = por %p141, %p142
      %p144 = scmp.ne.s32.totalorder %s135, %s136
      %p145 = scmp.eq.s32.totalorder %s20, 0
      %p146 = por %p144, %p145
      %p147 = scmp.ne.s32.totalorder %s135, %s136
      %p148 = scmp.eq.s32.totalorder %s21, 1
      %p149 = por %p147, %p148
      %p151 = scmp.ne.s32.totalorder %s136, %s150
      %p152 = scmp.eq.s32.totalorder %s21, 0
      %p153 = por %p151, %p152
      %s155 = sadd.s32 %s154, 1
      %p158 = scmp.eq.s32.totalorder %s15, 1
      %p159 = scmp.ne.s32.totalorder %s154, %s156
      %p160 = scmp.eq.s32.totalorder %s15, 0
      %p161 = por %p159, %p160
      %p162 = scmp.ne.s32.totalorder %s154, %s156
      %p163 = scmp.eq.s32.totalorder %s20, 1
      %p164 = por %p162, %p163
      %p165 = scmp.ne.s32.totalorder %s156, %s157
      %p166 = scmp.eq.s32.totalorder %s20, 0
      %p167 = por %p165, %p166
      %p168 = scmp.ne.s32.totalorder %s156, %s157
      %p169 = scmp.eq.s32.totalorder %s21, 1
      %p170 = por %p168, %p169
      %p172 = scmp.ne.s32.totalorder %s157, %s171
      %p173 = scmp.eq.s32.totalorder %s21, 0
      %p174 = por %p172, %p173
      %s175 = ssub.s32 %s22, %s34
      %s176 = ssub.s32 %s23, %s30
      %s177 = sor.u32 %s175, %s176
      %p178 = scmp.eq.s32.totalorder %s177, 0
      %s180 = sadd.s32 %s179, 1
      %s181 = scalar_select %p178, %s179, %s180
      %p184 = pneg %p178
      %p185 = scmp.eq.s32.totalorder %s15, 1
      %p186 = por %p184, %p185
      %p187 = scmp.ne.s32.totalorder %s179, %s182
      %p188 = scmp.eq.s32.totalorder %s15, 0
      %p189 = por %p187, %p188
      %p190 = scmp.ne.s32.totalorder %s179, %s182
      %p191 = scmp.eq.s32.totalorder %s20, 1
      %p192 = por %p190, %p191
      %p193 = scmp.ne.s32.totalorder %s182, %s183
      %p194 = scmp.eq.s32.totalorder %s20, 0
      %p195 = por %p193, %p194
      %p196 = scmp.ne.s32.totalorder %s182, %s183
      %p197 = scmp.eq.s32.totalorder %s21, 1
      %p198 = por %p196, %p197
      %p200 = scmp.ne.s32.totalorder %s183, %s199
      %p201 = scmp.eq.s32.totalorder %s21, 0
      %p202 = por %p200, %p201
      %p203 = scmp.le.s32.totalorder 1, %s15
      %p204 = scmp.lt.s32.totalorder %s15, 3
      %p205 = pnand %p203, %p204
      %p206 = pneg %p205
      // Predicated region
      $region9: #{tpu_custom_call.1} parent=5 // pred_check
        _
      $region10: #{tpu_custom_call.1} parent=5 // pred_check_branch
        %208 = sbr.rel (%p205) target = $region12
      $region11: #{tpu_custom_call.1} parent=5 // pred_region
        %s209 = ssub.s32 %s15, 1
        // Predicated region
        $region13: #{tpu_custom_call.1} parent=11 // pred_check
          %p210 = pneg %p104
        $region14: #{tpu_custom_call.1} parent=11 // pred_check_branch
          %212 = sbr.rel (%p210) target = $region16
        $region15: #{tpu_custom_call.1} parent=11 // pred_region
          _
        $region16: #{tpu_custom_call.1} parent=11 // pred_fallthru
          _
        // Predicated region
        $region17: #{tpu_custom_call.1} parent=11 // pred_check
          %p213 = pneg %p125
        $region18: #{tpu_custom_call.1} parent=11 // pred_check_branch
          %215 = sbr.rel (%p213) target = $region20
        $region19: #{tpu_custom_call.1} parent=11 // pred_region
          _
        $region20: #{tpu_custom_call.1} parent=11 // pred_fallthru
          _
        // Predicated region
        $region21: #{tpu_custom_call.1} parent=11 // pred_check
          %p216 = pneg %p146
        $region22: #{tpu_custom_call.1} parent=11 // pred_check_branch
          %218 = sbr.rel (%p216) target = $region24
        $region23: #{tpu_custom_call.1} parent=11 // pred_region
          _
        $region24: #{tpu_custom_call.1} parent=11 // pred_fallthru
          _
        // Predicated region
        $region25: #{tpu_custom_call.1} parent=11 // pred_check
          %p219 = pneg %p167
        $region26: #{tpu_custom_call.1} parent=11 // pred_check_branch
          %221 = sbr.rel (%p219) target = $region28
        $region27: #{tpu_custom_call.1} parent=11 // pred_region
          _
        $region28: #{tpu_custom_call.1} parent=11 // pred_fallthru
          _
      $region12: #{tpu_custom_call.1} parent=5 // pred_fallthru
        _
      %p222 = scmp.lt.s32.totalorder %s15, 2
      // Predicated region
      $region29: #{tpu_custom_call.1} parent=5 // pred_check
        %p223 = pneg %p222
      $region30: #{tpu_custom_call.1} parent=5 // pred_check_branch
        %225 = sbr.rel (%p223) target = $region32
      $region31: #{tpu_custom_call.1} parent=5 // pred_region
        // Predicated region
        $region33: #{tpu_custom_call.1} parent=31 // pred_check
          %p226 = pneg %p49
        $region34: #{tpu_custom_call.1} parent=31 // pred_check_branch
          %228 = sbr.rel (%p226) target = $region36
        $region35: #{tpu_custom_call.1} parent=31 // pred_region
          %s229 = smul.u32 2, %s23
          %p230 = scmp.lt.s32.totalorder %s22, 1
          %s231 = scalar_select %p230, %s22, 1
          %p232 = scmp.lt.s32.totalorder %s229, 1
          %s233 = scalar_select %p232, %s229, 1
          %s234 = smul.addr %s231, 2
          %s235 = sadd.s32 %s233, %s234
          %s236 = smul.addr %s235, 4
          %s237 = scalar_lea.vmem %s0, %s236
          %s238 = smul.u32 2, %s23
        $region36: #{tpu_custom_call.1} parent=31 // pred_fallthru
          _
        // Predicated region
        $region37: #{tpu_custom_call.1} parent=31 // pred_check
          %p239 = pneg %p77
        $region38: #{tpu_custom_call.1} parent=31 // pred_check_branch
          %241 = sbr.rel (%p239) target = $region40
        $region39: #{tpu_custom_call.1} parent=31 // pred_region
          %s242 = smul.u32 2, %s23
          %p243 = scmp.lt.s32.totalorder %s22, 1
          %s244 = scalar_select %p243, %s22, 1
          %p245 = scmp.lt.s32.totalorder %s242, 1
          %s246 = scalar_select %p245, %s242, 1
          %s247 = smul.addr %s244, 2
          %s248 = sadd.s32 %s246, %s247
          %s249 = scalar_lea.vmem %s1, %s248
          %s250 = smul.u32 2, %s23
        $region40: #{tpu_custom_call.1} parent=31 // pred_fallthru
          _
      $region32: #{tpu_custom_call.1} parent=5 // pred_fallthru
        _
      %p251 = scmp.le.s32.totalorder 1, %s15
      %p252 = scmp.lt.s32.totalorder %s15, 3
      %p253 = pnand %p251, %p252
      %p254 = pneg %p253
      // Predicated region
      $region41: #{tpu_custom_call.1} parent=5 // pred_check
        _
      $region42: #{tpu_custom_call.1} parent=5 // pred_check_branch
        %256 = sbr.rel (%p253) target = $region44
      $region43: #{tpu_custom_call.1} parent=5 // pred_region
        %s257 = ssub.s32 %s15, 1
        %s258 = smul.u32 2, %s25
        %p259 = scmp.lt.s32.totalorder %s24, 1
        %s260 = scalar_select %p259, %s24, 1
        %p261 = scmp.lt.s32.totalorder %s258, 1
        %s262 = scalar_select %p261, %s258, 1
        %s263 = smul.addr %s260, 2
        %s264 = sadd.s32 %s262, %s263
        %s265 = smul.addr %s264, 4
        %s266 = scalar_lea.vmem %s0, %s265
        %p267 = pneg %p55
        %p268 = pneg %p52
        %s269 = smul.u32 2, %s25
        %p270 = scmp.lt.s32.totalorder %s24, 1
        %s271 = scalar_select %p270, %s24, 1
        %p272 = scmp.lt.s32.totalorder %s269, 1
        %s273 = scalar_select %p272, %s269, 1
        %s274 = smul.addr %s271, 2
        %s275 = sadd.s32 %s273, %s274
        %s276 = scalar_lea.vmem %s1, %s275
        %p277 = pneg %p83
        %p278 = pneg %p80
        %p279 = pneg %p104
        %p280 = pneg %p101
        %p281 = pneg %p125
        %p282 = pneg %p122
        %p283 = pneg %p146
        %p284 = pneg %p143
        %p285 = pneg %p167
        %p286 = pneg %p164
        %p287 = pneg %p195
        %p288 = pneg %p192
        %s289 = sand.u32 %s182, 1
        %s290 = scalar_lea.sflag [#allocation3], %s289
        %s291 = sand.u32 %s182, 1
        %s292 = smul.addr %s291, 8
        %s293 = scalar_lea.vmem [#allocation2], %s292
        %s294 = smul.u32 2, %s25
        %p295 = scmp.lt.s32.totalorder %s24, 1
        %s296 = scalar_select %p295, %s24, 1
        %p297 = scmp.lt.s32.totalorder %s294, 1
        %s298 = scalar_select %p297, %s294, 1
        %s299 = smul.addr %s296, 2
        %s300 = sadd.s32 %s298, %s299
        %s301 = smul.addr %s300, 4
        %s302 = scalar_lea.vmem %s0, %s301
        %s303 = smul.u32 2, %s25
        %s304 = smul.u32 2, %s25
        %p305 = scmp.lt.s32.totalorder %s24, 1
        %s306 = scalar_select %p305, %s24, 1
        %p307 = scmp.lt.s32.totalorder %s304, 1
        %s308 = scalar_select %p307, %s304, 1
        %s309 = smul.addr %s306, 2
        %s310 = sadd.s32 %s308, %s309
        %s311 = scalar_lea.vmem %s1, %s310
        %s312 = smul.u32 2, %s25
        %s313 = smul.u32 2, %s25
        %v315 = vld [vmem:[%s311] sm:$0x3]
        %v316 = vld [vmem:[%s302] sm:$0xff]
        %v318 = vlaneseq
        %v319 = vshrl.u32 %v318, 7
        %v320 = vsub.s32 0, %v319
        %v321 = vrot.slane %v315, %v320
        %v322 = vlaneseq
        %v323 = vshrl.u32 %v322, 7
        %v324 = vsub.s32 1, %v323
        %v325 = vrot.slane %v315, %v324
        %v328 = vcombine.low %v321, %v325
        %v330 = vmul.f32 %v316, %v328
        %v331 = vld [vmem:[%s2] sm:$0xf]
        %v332 = vld [vmem:[%s2 + $0x4] sm:$0xf]
        %v333 = vld [vmem:[%s2 + $0x8] sm:$0xf]
        %v334 = vld [vmem:[%s2 + $0xc] sm:$0xf]
        %v336 = vcombine.high %v330, %v330
        %v338 = vpack.c.bf16 %v330, %v330
        %v339 = vpack.c.bf16 %v336, %v336
        %v340 = vld [vmem:[%s3] sm:$0xff]
        %v341 = vld [vmem:[%s3 + $0x8] sm:$0xff]
        %v342 = vld [vmem:[%s3 + $0x10] sm:$0xff]
        %v343 = vld [vmem:[%s3 + $0x18] sm:$0xff]
        %345 = vset.pattern.permute.xlu0 0
        %346 = vperm.xlu0 %345, %v340
        %v347 = vpop.permute.xlu0 %346
        %350 = vset.pattern.permute.xlu0 0
        %351 = vperm.xlu0 %350, %v341
        %v352 = vpop.permute.xlu0 %351
        %355 = vset.pattern.permute.xlu0 0
        %356 = vperm.xlu0 %355, %v342
        %v357 = vpop.permute.xlu0 %356
        %360 = vset.pattern.permute.xlu0 0
        %361 = vperm.xlu0 %360, %v343
        %v362 = vpop.permute.xlu0 %361
        %v368 = vunpack.c.l.b16 %v331
        %v369 = vunpack.c.l.b16 %v332
        %v370 = vunpack.c.l.b16 %v333
        %v371 = vunpack.c.l.b16 %v334
        %v372 = vpack.c.b16 %v369, %v368
        %v373 = vpack.c.b16 %v371, %v370
        %vm374 = vcmask 31744
        %v376 = vsel %vm374, %v372, 0
        %v379 = vsel %vm374, %v373, 0
        %vm381 = vcmask 1041408
        %v383 = vsel %vm381, %v338, 0
        %v386 = vsel %vm381, %v339, 0
        %388 = vmatprep.subr.bf16.mxu0 %v386
        %389 = vmatpush1.bf16.msra.mxu0 %v383
        %390 = vmatprep.subr.bf16.mxu0 0
        %391 = vmatpush1.bf16.msra.mxu0 0
        %392 = vmatprep.subr.bf16.mxu0 0
        %393 = vmatpush1.bf16.msra.mxu0 0
        %394 = vmatprep.subr.bf16.mxu0 0
        %395 = vmatpush1.bf16.msra.mxu0 0
        %396 = vmatprep.subr.bf16.mxu0 0
        %397 = vmatpush1.bf16.msra.mxu0 0
        %398 = vmatprep.subr.bf16.mxu0 0
        %399 = vmatpush1.bf16.msra.mxu0 0
        %400 = vmatprep.subr.bf16.mxu0 0
        %401 = vmatpush1.bf16.msra.mxu0 0
        %402 = vmatprep.subr.bf16.mxu0 0
        %403 = vmatpush1.bf16.msra.mxu0 0
        %404 = vmatprep.subr.bf16.mxu0 0
        %405 = vmatpush1.bf16.msra.mxu0 0
        %406 = vmatprep.subr.bf16.mxu0 0
        %407 = vmatpush1.bf16.msra.mxu0 0
        %408 = vmatprep.subr.bf16.mxu0 0
        %409 = vmatpush1.bf16.msra.mxu0 0
        %410 = vmatprep.subr.bf16.mxu0 0
        %411 = vmatpush1.bf16.msra.mxu0 0
        %412 = vmatprep.subr.bf16.mxu0 0
        %413 = vmatpush1.bf16.msra.mxu0 0
        %414 = vmatprep.subr.bf16.mxu0 0
        %415 = vmatpush1.bf16.msra.mxu0 0
        %416 = vmatprep.subr.bf16.mxu0 0
        %417 = vmatpush1.bf16.msra.mxu0 0
        %418 = vmatprep.subr.bf16.mxu0 0
        %419 = vmatpush1.bf16.msra.mxu0 0
        %420 = vmatprep.mubr.bf16.mxu0 0
        %421 = vmatmul.mubr.bf16.gmra.mrb[0].mxu0 %v376
        %v422 = vpop.f32.mrb[0].mxu0
        %v423 = vadd.f32 %v347, %v422
        %v424 = vpop.f32.mrb[0].mxu0
        %v425 = vadd.f32 %v347, %v424
        %v426 = vpop.f32.mrb[0].mxu0
        %v427 = vadd.f32 %v352, %v426
        %v428 = vpop.f32.mrb[0].mxu0
        %v429 = vadd.f32 %v352, %v428
        %430 = vmatprep.mubr.bf16.mxu0 0
        %431 = vmatmul.mubr.bf16.gmra.mrb[0].mxu0 %v379
        %v432 = vpop.f32.mrb[0].mxu0
        %v433 = vadd.f32 %v357, %v432
        %v434 = vpop.f32.mrb[0].mxu0
        %v435 = vadd.f32 %v357, %v434
        %v436 = vpop.f32.mrb[0].mxu0
        %v437 = vadd.f32 %v362, %v436
        %v438 = vpop.f32.mrb[0].mxu0
        %v439 = vadd.f32 %v362, %v438
        %440 = vdwg.mxu0
        %v441 = vmax.f32 %v423, 0.0
        %v442 = vmax.f32 %v425, 0.0
        %v443 = vmax.f32 %v427, 0.0
        %v444 = vmax.f32 %v429, 0.0
        %v445 = vmax.f32 %v433, 0.0
        %v446 = vmax.f32 %v435, 0.0
        %v447 = vmax.f32 %v437, 0.0
        %v448 = vmax.f32 %v439, 0.0
        %v449 = vmul.f32 %v441, %v321
        %v450 = vmul.f32 %v442, %v325
        %v451 = vmul.f32 %v443, %v321
        %v452 = vmul.f32 %v444, %v325
        %v453 = vmul.f32 %v445, %v321
        %v454 = vmul.f32 %v446, %v325
        %v455 = vmul.f32 %v447, %v321
        %v456 = vmul.f32 %v448, %v325
        %v457 = vld [vmem:[%s4] sm:$0x3]
        %v458 = vpack.c.bf16 %v451, %v449
        %v459 = vpack.c.bf16 %v452, %v450
        %v460 = vpack.c.bf16 %v455, %v453
        %v461 = vpack.c.bf16 %v456, %v454
        %v462 = vld [vmem:[%s5] sm:$0xf]
        %464 = vset.pattern.permute.xlu0 0
        %465 = vperm.xlu0 %464, %v462
        %v466 = vpop.permute.xlu0 %465
        %vm468 = vcmask 261120
        %v470 = vsel %vm468, %v457, 0
        %472 = vmatprep.subr.bf16.mxu0 %v459
        %473 = vmatpush1.bf16.msra.mxu0 %v458
        %474 = vmatprep.subr.bf16.mxu0 %v461
        %475 = vmatpush1.bf16.msra.mxu0 %v460
        %476 = vmatprep.subr.bf16.mxu0 0
        %477 = vmatpush1.bf16.msra.mxu0 0
        %478 = vmatprep.subr.bf16.mxu0 0
        %479 = vmatpush1.bf16.msra.mxu0 0
        %480 = vmatprep.subr.bf16.mxu0 0
        %481 = vmatpush1.bf16.msra.mxu0 0
        %482 = vmatprep.subr.bf16.mxu0 0
        %483 = vmatpush1.bf16.msra.mxu0 0
        %484 = vmatprep.subr.bf16.mxu0 0
        %485 = vmatpush1.bf16.msra.mxu0 0
        %486 = vmatprep.subr.bf16.mxu0 0
        %487 = vmatpush1.bf16.msra.mxu0 0
        %488 = vmatprep.subr.bf16.mxu0 0
        %489 = vmatpush1.bf16.msra.mxu0 0
        %490 = vmatprep.subr.bf16.mxu0 0
        %491 = vmatpush1.bf16.msra.mxu0 0
        %492 = vmatprep.subr.bf16.mxu0 0
        %493 = vmatpush1.bf16.msra.mxu0 0
        %494 = vmatprep.subr.bf16.mxu0 0
        %495 = vmatpush1.bf16.msra.mxu0 0
        %496 = vmatprep.subr.bf16.mxu0 0
        %497 = vmatpush1.bf16.msra.mxu0 0
        %498 = vmatprep.subr.bf16.mxu0 0
        %499 = vmatpush1.bf16.msra.mxu0 0
        %500 = vmatprep.subr.bf16.mxu0 0
        %501 = vmatpush1.bf16.msra.mxu0 0
        %502 = vmatprep.subr.bf16.mxu0 0
        %503 = vmatpush1.bf16.msra.mxu0 0
        %504 = vmatprep.mubr.bf16.mxu0 0
        %505 = vmatmul.mubr.bf16.gmra.mrb[0].mxu0 %v470
        %v506 = vpop.f32.mrb[0].mxu0
        %v507 = vadd.f32 %v466, %v506
        %v508 = vpop.f32.mrb[0].mxu0
        %v509 = vadd.f32 %v466, %v508
        %v510 = vpop.f32.mrb[0].mxu0
        %v511 = vpop.f32.mrb[0].mxu0
        %512 = vdwg.mxu0
        %v513 = vmul.f32 %v507, %v321
        %v514 = vmul.f32 %v509, %v325
        %v517 = vcombine.low %v513, %v514
        %519 = vst [vmem:[%s293] sm:$0xff] %v517
        %s520 = sand.u32 %s182, 1
        %s521 = scalar_lea.sflag [#allocation3], %s520
        %s522 = sand.u32 %s182, 1
        %s523 = smul.addr %s522, 8
        %s524 = scalar_lea.vmem [#allocation2], %s523
        // Predicated region
        $region45: #{tpu_custom_call.1} parent=43 // pred_check
          %p525 = pneg %p192
        $region46: #{tpu_custom_call.1} parent=43 // pred_check_branch
          %527 = sbr.rel (%p525) target = $region48
        $region47: #{tpu_custom_call.1} parent=43 // pred_region
          %s528 = smul.u32 2, %s25
          %s530 = ssub.s32 128, 128
          %531 = vsyncadd %s521, %s530
          %s532 = smul.addr %s24, 2
          %s533 = sadd.s32 %s528, %s532
          %s534 = smul.addr %s533, 64
          %s535 = scalar_lea.hbm %s6, %s534
          %s537 = sshll.u32 %s524, 4
          %s538 = int_to_ptr.vmem [resolvable:$true] %s537
          %540 = dma.vmem_to_hbm [thread:$0]  %s538, 128, %s535, %s521
        $region48: #{tpu_custom_call.1} parent=43 // pred_fallthru
          _
      $region44: #{tpu_custom_call.1} parent=5 // pred_fallthru
        _
      %p541 = scmp.le.s32.totalorder 2, %s15
      // Predicated region
      $region49: #{tpu_custom_call.1} parent=5 // pred_check
        %p542 = pneg %p541
      $region50: #{tpu_custom_call.1} parent=5 // pred_check_branch
        %544 = sbr.rel (%p542) target = $region52
      $region51: #{tpu_custom_call.1} parent=5 // pred_region
        %s545 = ssub.s32 %s15, 2
        // Predicated region
        $region53: #{tpu_custom_call.1} parent=51 // pred_check
          %p546 = pneg %p198
        $region54: #{tpu_custom_call.1} parent=51 // pred_check_branch
          %548 = sbr.rel (%p546) target = $region56
        $region55: #{tpu_custom_call.1} parent=51 // pred_region
          %s549 = sand.u32 %s183, 1
          %s550 = scalar_lea.sflag [#allocation3], %s549
          %s551 = sand.u32 %s183, 1
          %s552 = smul.addr %s551, 8
          %s553 = scalar_lea.vmem [#allocation2], %s552
          %554 = dma.done %s550, 128
        $region56: #{tpu_custom_call.1} parent=51 // pred_fallthru
          _
      $region52: #{tpu_custom_call.1} parent=5 // pred_fallthru
        _
    $region6: #{tpu_custom_call.1} parent=1 // loop_footer
      %s19 = sadd.s32 1, %s15
    $region7: #{tpu_custom_call.1} parent=1 // loop_footer_branch
      %14 = sbr.rel target = $region3
    $region8: #{tpu_custom_call.1} parent=1 // loop_exit
      _
    %555 = vsyncpa [#allocation3], 1
    %s556 = scalar_lea.sflag [#allocation3], 1
    %557 = vsyncpa %s556, 1

</llo_original>
